<compile_context>
chip_gen: v7x
topology: tpu7x:2x2x1
jax: 0.10.0
libtpu: 0.0.40
codegen_flags: <defaults>
</compile_context>

<pallas_src>
import jax
import jax.numpy as jnp
from jax.experimental import pallas as pl
from jax.experimental.pallas import tpu as pltpu

_IN_DIM = 32
_H1_DIM = 64
_H2_DIM = 128
_OUT_DIM = 28 * 28   # 784


def _sigmoid_eup(logits):
    # sigmoid(x) = 0.5 * tanh(0.5 * x) + 0.5 -> single EUP transcendental (tanh);
    # the mul/add run on the VALU slot, which is idle in this epilogue.
    return 0.5 * jnp.tanh(0.5 * logits) + 0.5


def _make_kernel(has_xe2, has_xe1):
    """Build a specialized kernel for the given skip-connection combination."""

    def kernel(*refs):
        refs = list(refs)
        x_ref = refs.pop(0)
        xe2_ref = refs.pop(0) if has_xe2 else None
        xe1_ref = refs.pop(0) if has_xe1 else None
        w1_ref, b1_ref, w2_ref, b2_ref, w3_ref, b3_ref, o_ref = refs

        # Layer 1: (TB, 32) @ (32, 64), bf16 operands, f32 accumulate.
        h = jnp.dot(x_ref[...].astype(jnp.bfloat16), w1_ref[...],
                    preferred_element_type=jnp.float32) + b1_ref[...]
        h = jnp.maximum(h, 0.0)
        if has_xe2:
            h = h + xe2_ref[...]

        # Layer 2: (TB, 64) @ (64, 128).
        h = jnp.dot(h.astype(jnp.bfloat16), w2_ref[...],
                    preferred_element_type=jnp.float32) + b2_ref[...]
        h = jnp.maximum(h, 0.0)
        if has_xe1:
            h = h + xe1_ref[...]

        # Layer 3: (TB, 128) @ (128, 784) -> carries ~90% of the FLOPs.
        logits = jnp.dot(h.astype(jnp.bfloat16), w3_ref[...],
                         preferred_element_type=jnp.float32) + b3_ref[...]
        o_ref[...] = _sigmoid_eup(logits).astype(o_ref.dtype)

    return kernel


def _choose_tiling(B, max_block=1024, min_split=256):
    """Pick (block_b, num_tiles) that minimizes batch padding.

    * block_b is a multiple of 8 (sublane alignment; 784 last dim is full-extent).
    * at least 2 tiles once B is big enough, so the "parallel" batch axis can be
      split across v7x's two TensorCores.
    * block_b <= max_block keeps double-buffered output tiles (~3 MiB each at
      TB=1024 f32) comfortably inside v7x's 64 MiB VMEM while still amortizing
      the ~0.35 us/grid-step overhead on v5e/v6e.
    """
    B8 = ((B + 7) // 8) * 8
    if B8 <= min_split:
        return B8, 1
    num_tiles = max(2, pl.cdiv(B8, max_block))
    block_b = ((pl.cdiv(B8, num_tiles) + 7) // 8) * 8
    return block_b, num_tiles


def prepare_params(params):
    """One-time parameter prep: weights -> bf16 (MXU-native), biases stay f32.

    Call once and reuse across forward calls (keeps the cast off the launch path).
    """
    w1, b1, w2, b2, w3, b3 = params
    return (w1.astype(jnp.bfloat16), b1.astype(jnp.float32),
            w2.astype(jnp.bfloat16), b2.astype(jnp.float32),
            w3.astype(jnp.bfloat16), b3.astype(jnp.float32))


def decoder_forward(x, prepared_params, xe2=None, xe1=None, *,
                    block_b=None, out_dtype=jnp.float32):
    """Pallas implementation of Decoder.forward(x, xe2, xe1).

    `prepared_params` must come from prepare_params().  `out_dtype=jnp.bfloat16`
    halves output HBM writeback if the consumer tolerates it (default f32 keeps
    the original semantics).
    """
    B = x.shape[0]
    w1, b1, w2, b2, w3, b3 = prepared_params

    if block_b is None:
        block_b, num_tiles = _choose_tiling(B)
    else:
        block_b = max(8, ((block_b + 7) // 8) * 8)
        num_tiles = pl.cdiv(((B + 7) // 8) * 8, block_b)
    B_pad = block_b * num_tiles

    if B_pad != B:
        pad = B_pad - B
        x = jnp.pad(x, ((0, pad), (0, 0)))
        if xe2 is not None:
            xe2 = jnp.pad(xe2, ((0, pad), (0, 0)))
        if xe1 is not None:
            xe1 = jnp.pad(xe1, ((0, pad), (0, 0)))

    def batch_spec(feat):
        return pl.BlockSpec((block_b, feat), lambda i: (i, 0))

    def resident_spec(arr):
        # Constant block index -> weights/biases stay VMEM-resident across tiles.
        return pl.BlockSpec(arr.shape, lambda i: (0, 0))

    inputs = [x]
    in_specs = [batch_spec(_IN_DIM)]
    if xe2 is not None:
        inputs.append(xe2)
        in_specs.append(batch_spec(_H1_DIM))
    if xe1 is not None:
        inputs.append(xe1)
        in_specs.append(batch_spec(_H2_DIM))
    weights = (w1, b1, w2, b2, w3, b3)
    inputs += list(weights)
    in_specs += [resident_spec(a) for a in weights]

    kernel = _make_kernel(xe2 is not None, xe1 is not None)

    out = pl.pallas_call(
        kernel,
        out_shape=jax.ShapeDtypeStruct((B_pad, _OUT_DIM), out_dtype),
        grid=(num_tiles,),
        in_specs=in_specs,
        out_specs=pl.BlockSpec((block_b, _OUT_DIM), lambda i: (i, 0)),
        compiler_params=pltpu.CompilerParams(
            dimension_semantics=("parallel",),
            vmem_limit_bytes=48 * 1024 * 1024),
    )(*inputs)

    # Only slice off padded batch rows (no column slice: output is native 784 wide).
    return out if B_pad == B else out[:B]


def init_params(key):
    """Deterministic init matching the torch Linear shapes (stored transposed)."""
    dims = [(_IN_DIM, _H1_DIM), (_H1_DIM, _H2_DIM), (_H2_DIM, _OUT_DIM)]
    params = []
    for (fan_in, fan_out) in dims:
        key, kw, kb = jax.random.split(key, 3)
        bound = 1.0 / jnp.sqrt(fan_in)
        w = jax.random.uniform(kw, (fan_in, fan_out), jnp.float32, -bound, bound)
        b = jax.random.uniform(kb, (1, fan_out), jnp.float32, -bound, bound)
        params += [w, b]
    return tuple(params)


def decoder_reference(x, params, xe2=None, xe1=None):
    """Pure-JAX f32 reference of the PyTorch forward for correctness checks."""
    w1, b1, w2, b2, w3, b3 = params
    x3 = jax.nn.relu(x @ w1 + b1)
    h2 = x3 if xe2 is None else x3 + xe2
    x2 = jax.nn.relu(h2 @ w2 + b2)
    h1 = x2 if xe1 is None else x2 + xe1
    return jax.nn.sigmoid(h1 @ w3 + b3)


if __name__ == "__main__":
    key = jax.random.PRNGKey(0)
    key, kx, k2, k1 = jax.random.split(key, 4)

    # B not a multiple of 8 -> exercises the batch-padding + row-slicing path too.
    B = 20
    x = jax.random.normal(kx, (B, _IN_DIM), jnp.float32)
    xe2 = jax.random.normal(k2, (B, _H1_DIM), jnp.float32)
    xe1 = jax.random.normal(k1, (B, _H2_DIM), jnp.float32)

    params = init_params(jax.random.PRNGKey(42))
    prepared = prepare_params(params)   # one-time bf16 weight prep

    # Tolerance accounts for bf16 matmul operands (f32 accumulation); sigmoid
    # outputs live in [0, 1] so 2e-2 absolute still catches real bugs.
    TOL = 2e-2

    cases = [
        (None, None),   # no skips  -> specialized kernel, no zero DMAs
        (xe2, None),    # xe2 only
        (None, xe1),    # xe1 only
        (xe2, xe1),     # both skips
    ]
    for c_xe2, c_xe1 in cases:
        out = jax.block_until_ready(
            decoder_forward(x, prepared, xe2=c_xe2, xe1=c_xe1))
        ref = decoder_reference(x, params, xe2=c_xe2, xe1=c_xe1)
        assert out.shape == (B, _OUT_DIM)
        assert jnp.allclose(out, ref, atol=TOL, rtol=TOL), (
            float(jnp.abs(out - ref).max()))

    print("KERNEL_OK")
</pallas_src>

<mosaic_0001>
module attributes {stable_mosaic.version = 11 : i64} {
  func.func @kernel(%arg0: i32, %arg1: memref<24x32xf32, #tpu.memory_space<vmem>>, %arg2: memref<32x64xbf16, #tpu.memory_space<vmem>>, %arg3: memref<1x64xf32, #tpu.memory_space<vmem>>, %arg4: memref<64x128xbf16, #tpu.memory_space<vmem>>, %arg5: memref<1x128xf32, #tpu.memory_space<vmem>>, %arg6: memref<128x784xbf16, #tpu.memory_space<vmem>>, %arg7: memref<1x784xf32, #tpu.memory_space<vmem>>, %arg8: memref<24x784xf32, #tpu.memory_space<vmem>>) attributes {dimension_semantics = [#tpu.dimension_semantics<parallel>], iteration_bounds = array<i64: 1>, scalar_prefetch = 0 : i64, scratch_operands = 0 : i64, tpu.core_type = #tpu.core_type<tc>, window_params = [{transform_indices = @transform_0, window_bounds = array<i64: 24, 32>}, {pipeline_mode = #tpu.pipeline_mode<synchronous>, transform_indices = @transform_1, window_bounds = array<i64: 32, 64>}, {pipeline_mode = #tpu.pipeline_mode<synchronous>, transform_indices = @transform_2, window_bounds = array<i64: 1, 64>}, {pipeline_mode = #tpu.pipeline_mode<synchronous>, transform_indices = @transform_3, window_bounds = array<i64: 64, 128>}, {pipeline_mode = #tpu.pipeline_mode<synchronous>, transform_indices = @transform_4, window_bounds = array<i64: 1, 128>}, {pipeline_mode = #tpu.pipeline_mode<synchronous>, transform_indices = @transform_5, window_bounds = array<i64: 128, 784>}, {pipeline_mode = #tpu.pipeline_mode<synchronous>, transform_indices = @transform_6, window_bounds = array<i64: 1, 784>}, {transform_indices = @transform_7, window_bounds = array<i64: 24, 784>}]} {
    %c0 = arith.constant 0 : index
    %c0_0 = arith.constant 0 : index
    %0 = vector.load %arg1[%c0, %c0_0] : memref<24x32xf32, #tpu.memory_space<vmem>>, vector<24x32xf32>
    %1 = arith.truncf %0 : vector<24x32xf32> to vector<24x32xbf16>
    %c0_1 = arith.constant 0 : index
    %c0_2 = arith.constant 0 : index
    %2 = vector.load %arg2[%c0_1, %c0_2] : memref<32x64xbf16, #tpu.memory_space<vmem>>, vector<32x64xbf16>
    %cst = arith.constant dense<0.000000e+00> : vector<24x64xf32>
    %3 = tpu.matmul %1, %2, %cst {dimension_numbers = #tpu.dot_dimension_numbers<[1], [0], [0], [1], [0, 0, 1, 1], [], []>} : vector<24x32xbf16>, vector<32x64xbf16>, vector<24x64xf32> -> vector<24x64xf32>
    %c0_3 = arith.constant 0 : index
    %c0_4 = arith.constant 0 : index
    %4 = vector.load %arg3[%c0_3, %c0_4] : memref<1x64xf32, #tpu.memory_space<vmem>>, vector<1x64xf32>
    %5 = vector.broadcast %4 : vector<1x64xf32> to vector<24x64xf32>
    %6 = arith.addf %3, %5 : vector<24x64xf32>
    %cst_5 = arith.constant 0.000000e+00 : f32
    %7 = vector.broadcast %cst_5 : f32 to vector<24x64xf32>
    %8 = arith.maximumf %6, %7 : vector<24x64xf32>
    %9 = arith.truncf %8 : vector<24x64xf32> to vector<24x64xbf16>
    %c0_6 = arith.constant 0 : index
    %c0_7 = arith.constant 0 : index
    %10 = vector.load %arg4[%c0_6, %c0_7] : memref<64x128xbf16, #tpu.memory_space<vmem>>, vector<64x128xbf16>
    %cst_8 = arith.constant dense<0.000000e+00> : vector<24x128xf32>
    %11 = tpu.matmul %9, %10, %cst_8 {dimension_numbers = #tpu.dot_dimension_numbers<[1], [0], [0], [1], [0, 0, 1, 1], [], []>} : vector<24x64xbf16>, vector<64x128xbf16>, vector<24x128xf32> -> vector<24x128xf32>
    %c0_9 = arith.constant 0 : index
    %c0_10 = arith.constant 0 : index
    %12 = vector.load %arg5[%c0_9, %c0_10] : memref<1x128xf32, #tpu.memory_space<vmem>>, vector<1x128xf32>
    %13 = vector.broadcast %12 : vector<1x128xf32> to vector<24x128xf32>
    %14 = arith.addf %11, %13 : vector<24x128xf32>
    %cst_11 = arith.constant 0.000000e+00 : f32
    %15 = vector.broadcast %cst_11 : f32 to vector<24x128xf32>
    %16 = arith.maximumf %14, %15 : vector<24x128xf32>
    %17 = arith.truncf %16 : vector<24x128xf32> to vector<24x128xbf16>
    %c0_12 = arith.constant 0 : index
    %c0_13 = arith.constant 0 : index
    %18 = vector.load %arg6[%c0_12, %c0_13] : memref<128x784xbf16, #tpu.memory_space<vmem>>, vector<128x784xbf16>
    %cst_14 = arith.constant dense<0.000000e+00> : vector<24x784xf32>
    %19 = tpu.matmul %17, %18, %cst_14 {dimension_numbers = #tpu.dot_dimension_numbers<[1], [0], [0], [1], [0, 0, 1, 1], [], []>} : vector<24x128xbf16>, vector<128x784xbf16>, vector<24x784xf32> -> vector<24x784xf32>
    %c0_15 = arith.constant 0 : index
    %c0_16 = arith.constant 0 : index
    %20 = vector.load %arg7[%c0_15, %c0_16] : memref<1x784xf32, #tpu.memory_space<vmem>>, vector<1x784xf32>
    %21 = vector.broadcast %20 : vector<1x784xf32> to vector<24x784xf32>
    %22 = arith.addf %19, %21 : vector<24x784xf32>
    %cst_17 = arith.constant 5.000000e-01 : f32
    %23 = vector.broadcast %cst_17 : f32 to vector<24x784xf32>
    %24 = arith.mulf %23, %22 : vector<24x784xf32>
    %25 = math.tanh %24 : vector<24x784xf32>
    %cst_18 = arith.constant 5.000000e-01 : f32
    %26 = vector.broadcast %cst_18 : f32 to vector<24x784xf32>
    %27 = arith.mulf %26, %25 : vector<24x784xf32>
    %cst_19 = arith.constant 5.000000e-01 : f32
    %28 = vector.broadcast %cst_19 : f32 to vector<24x784xf32>
    %29 = arith.addf %27, %28 : vector<24x784xf32>
    %c0_20 = arith.constant 0 : index
    %c0_21 = arith.constant 0 : index
    %30 = vector.load %arg8[%c0_20, %c0_21] : memref<24x784xf32, #tpu.memory_space<vmem>>, vector<24x784xf32>
    tpu.vector_store %arg8[%c0_20, %c0_21], %29 {strides = array<i32>} : memref<24x784xf32, #tpu.memory_space<vmem>>, vector<24x784xf32>,
    return
  }
  func.func @transform_0(%arg0: i32) -> (i32, i32) {
    %c0_i32 = arith.constant 0 : i32
    %c0_i32_0 = arith.constant 0 : i32
    return %arg0, %c0_i32 : i32, i32
  }
  func.func @transform_1(%arg0: i32) -> (i32, i32) {
    %c0_i32 = arith.constant 0 : i32
    %c0_i32_0 = arith.constant 0 : i32
    %c0_i32_1 = arith.constant 0 : i32
    return %c0_i32, %c0_i32_0 : i32, i32
  }
  func.func @transform_2(%arg0: i32) -> (i32, i32) {
    %c0_i32 = arith.constant 0 : i32
    %c0_i32_0 = arith.constant 0 : i32
    %c0_i32_1 = arith.constant 0 : i32
    return %c0_i32, %c0_i32_0 : i32, i32
  }
  func.func @transform_3(%arg0: i32) -> (i32, i32) {
    %c0_i32 = arith.constant 0 : i32
    %c0_i32_0 = arith.constant 0 : i32
    %c0_i32_1 = arith.constant 0 : i32
    return %c0_i32, %c0_i32_0 : i32, i32
  }
  func.func @transform_4(%arg0: i32) -> (i32, i32) {
    %c0_i32 = arith.constant 0 : i32
    %c0_i32_0 = arith.constant 0 : i32
    %c0_i32_1 = arith.constant 0 : i32
    return %c0_i32, %c0_i32_0 : i32, i32
  }
  func.func @transform_5(%arg0: i32) -> (i32, i32) {
    %c0_i32 = arith.constant 0 : i32
    %c0_i32_0 = arith.constant 0 : i32
    %c0_i32_1 = arith.constant 0 : i32
    return %c0_i32, %c0_i32_0 : i32, i32
  }
  func.func @transform_6(%arg0: i32) -> (i32, i32) {
    %c0_i32 = arith.constant 0 : i32
    %c0_i32_0 = arith.constant 0 : i32
    %c0_i32_1 = arith.constant 0 : i32
    return %c0_i32, %c0_i32_0 : i32, i32
  }
  func.func @transform_7(%arg0: i32) -> (i32, i32) {
    %c0_i32 = arith.constant 0 : i32
    %c0_i32_0 = arith.constant 0 : i32
    return %arg0, %c0_i32 : i32, i32
  }
}

</mosaic_0001>

<llo_original>
// kernel: tpu_custom_call.1
$region0: #{tpu_custom_call.1}
  #allocation0 [shape = 'u32[]', space=smem, size = 0x4, offset = 0x4, fixed_abs, tag = 'smem constant byte address 0x4 - core index']
  #allocation1 [shape = 'u32[144,128]{1,0:T(1,128)}', space=vmem, size = 0x12000, scoped, tag = 'internal scratch']
  %s0 = inlined_call_operand.vmem [shape: f32[24,32], index: 0, kind: input, shape index: {}]
  %s1 = inlined_call_operand.vmem [shape: bf16[32,64], index: 1, kind: input, shape index: {}]
  %s2 = inlined_call_operand.vmem [shape: f32[1,64], index: 2, kind: input, shape index: {}]
  %s3 = inlined_call_operand.vmem [shape: bf16[64,128], index: 3, kind: input, shape index: {}]
  %s4 = inlined_call_operand.vmem [shape: f32[1,128], index: 4, kind: input, shape index: {}]
  %s5 = inlined_call_operand.vmem [shape: bf16[128,784], index: 5, kind: input, shape index: {}]
  %s6 = inlined_call_operand.vmem [shape: f32[1,784], index: 6, kind: input, shape index: {}]
  %s7 = inlined_call_operand.hbm [shape: f32[24,784], index: 7, kind: output, shape index: {}]
  %s8 = sld [smem:[#allocation0]]
  $region38: #{tpu_custom_call.1} parent=0
    _
  %s10 = ssub.s32 1, %s8
  %s11 = scalar_select 0, %s10, %s8
  $region1: #{tpu_custom_call.1} parent=0
    #allocation2 [shape = 'u8[86016]{0}', space=vmem, size = 0x15000, scoped, tag = 'output window, operand 0, single buffered']
    #allocation3 [shape = 's32[1]{0}', space=sflag, size = 0x4, scoped, tag = 'scoped memory for tpu_custom_call.1']
    %12 = vsyncpa [#allocation3], 0
    // Predicated region
    $region2: #{tpu_custom_call.1} parent=1 // pred_check
      _
    $region3: #{tpu_custom_call.1} parent=1 // pred_check_branch
      %14 = sbr.rel (0) target = $region5
    $region4: #{tpu_custom_call.1} parent=1 // pred_region
      _
    $region5: #{tpu_custom_call.1} parent=1 // pred_fallthru
      _
    // Predicated region
    $region6: #{tpu_custom_call.1} parent=1 // pred_check
      _
    $region7: #{tpu_custom_call.1} parent=1 // pred_check_branch
      %16 = sbr.rel (0) target = $region9
    $region8: #{tpu_custom_call.1} parent=1 // pred_region
      _
    $region9: #{tpu_custom_call.1} parent=1 // pred_fallthru
      _
    // Predicated region
    $region10: #{tpu_custom_call.1} parent=1 // pred_check
      _
    $region11: #{tpu_custom_call.1} parent=1 // pred_check_branch
      %18 = sbr.rel (0) target = $region13
    $region12: #{tpu_custom_call.1} parent=1 // pred_region
      _
    $region13: #{tpu_custom_call.1} parent=1 // pred_fallthru
      _
    // Predicated region
    $region14: #{tpu_custom_call.1} parent=1 // pred_check
      _
    $region15: #{tpu_custom_call.1} parent=1 // pred_check_branch
      %20 = sbr.rel (0) target = $region17
    $region16: #{tpu_custom_call.1} parent=1 // pred_region
      _
    $region17: #{tpu_custom_call.1} parent=1 // pred_fallthru
      _
    // Predicated region
    $region18: #{tpu_custom_call.1} parent=1 // pred_check
      _
    $region19: #{tpu_custom_call.1} parent=1 // pred_check_branch
      %22 = sbr.rel (0) target = $region21
    $region20: #{tpu_custom_call.1} parent=1 // pred_region
      _
    $region21: #{tpu_custom_call.1} parent=1 // pred_fallthru
      _
    // Predicated region
    $region22: #{tpu_custom_call.1} parent=1 // pred_check
      _
    $region23: #{tpu_custom_call.1} parent=1 // pred_check_branch
      %24 = sbr.rel (0) target = $region25
    $region24: #{tpu_custom_call.1} parent=1 // pred_region
      _
    $region25: #{tpu_custom_call.1} parent=1 // pred_fallthru
      _
    // Predicated region
    $region26: #{tpu_custom_call.1} parent=1 // pred_check
      _
    $region27: #{tpu_custom_call.1} parent=1 // pred_check_branch
      %26 = sbr.rel (0) target = $region29
    $region28: #{tpu_custom_call.1} parent=1 // pred_region
      _
    $region29: #{tpu_custom_call.1} parent=1 // pred_fallthru
      _
    %v28 = vld [vmem:[%s0] sm:$0xff]
    %v29 = vld [vmem:[%s0 + $0x8] sm:$0xff]
    %v30 = vld [vmem:[%s0 + $0x10] sm:$0xff]
    %v31 = vpack.c.bf16 %v29, %v28
    %v32 = vpack.c.bf16 %v30, %v30
    %v33 = vld [vmem:[%s1] sm:$0xf]
    %v34 = vld [vmem:[%s1 + $0x4] sm:$0xf]
    %v35 = vld [vmem:[%s1 + $0x8] sm:$0xf]
    %v36 = vld [vmem:[%s1 + $0xc] sm:$0xf]
    %v37 = vld [vmem:[%s2] sm:$0x1]
    %v39 = vlaneseq
    %v40 = vshrl.u32 %v39, 7
    %v41 = vsub.s32 0, %v40
    %v42 = vrot.slane %v37, %v41
    %v48 = vunpack.c.l.b16 %v33
    %v49 = vunpack.c.l.b16 %v34
    %v50 = vunpack.c.l.b16 %v35
    %v51 = vunpack.c.l.b16 %v36
    %v52 = vpack.c.b16 %v49, %v48
    %v53 = vpack.c.b16 %v51, %v50
    %vm56 = vcmask 261120
    %v58 = vsel %vm56, %v31, 0
    %v61 = vsel %vm56, %v32, 0
    %63 = vmatprep.subr.bf16.mxu0 0
    %64 = vmatpush1.bf16.msra.mxu0 %v52
    %65 = vmatprep.subr.bf16.mxu0 0
    %66 = vmatpush1.bf16.msra.mxu0 %v53
    %67 = vmatprep.subr.bf16.mxu0 0
    %68 = vmatpush1.bf16.msra.mxu0 0
    %69 = vmatprep.subr.bf16.mxu0 0
    %70 = vmatpush1.bf16.msra.mxu0 0
    %71 = vmatprep.subr.bf16.mxu0 0
    %72 = vmatpush1.bf16.msra.mxu0 0
    %73 = vmatprep.subr.bf16.mxu0 0
    %74 = vmatpush1.bf16.msra.mxu0 0
    %75 = vmatprep.subr.bf16.mxu0 0
    %76 = vmatpush1.bf16.msra.mxu0 0
    %77 = vmatprep.subr.bf16.mxu0 0
    %78 = vmatpush1.bf16.msra.mxu0 0
    %79 = vmatprep.subr.bf16.mxu0 0
    %80 = vmatpush1.bf16.msra.mxu0 0
    %81 = vmatprep.subr.bf16.mxu0 0
    %82 = vmatpush1.bf16.msra.mxu0 0
    %83 = vmatprep.subr.bf16.mxu0 0
    %84 = vmatpush1.bf16.msra.mxu0 0
    %85 = vmatprep.subr.bf16.mxu0 0
    %86 = vmatpush1.bf16.msra.mxu0 0
    %87 = vmatprep.subr.bf16.mxu0 0
    %88 = vmatpush1.bf16.msra.mxu0 0
    %89 = vmatprep.subr.bf16.mxu0 0
    %90 = vmatpush1.bf16.msra.mxu0 0
    %91 = vmatprep.subr.bf16.mxu0 0
    %92 = vmatpush1.bf16.msra.mxu0 0
    %93 = vmatprep.subr.bf16.mxu0 0
    %94 = vmatpush1.bf16.msra.mxu0 0
    %95 = vmatprep.mubr.bf16.mxu0 0
    %96 = vmatmul.mubr.bf16.gmra.mrb[0].mxu0 %v58
    %v97 = vpop.f32.mrb[0].mxu0
    %v98 = vadd.f32 %v42, %v97
    %v99 = vpop.f32.mrb[0].mxu0
    %v100 = vpop.f32.mrb[0].mxu0
    %v101 = vadd.f32 %v42, %v100
    %v102 = vpop.f32.mrb[0].mxu0
    %103 = vmatprep.mubr.bf16.mxu0 0
    %104 = vmatmul.mubr.bf16.gmra.mrb[0].mxu0 %v61
    %v105 = vpop.f32.mrb[0].mxu0
    %v106 = vadd.f32 %v42, %v105
    %v107 = vpop.f32.mrb[0].mxu0
    %v108 = vpop.f32.mrb[0].mxu0
    %v109 = vpop.f32.mrb[0].mxu0
    %110 = vdwg.mxu0
    %v111 = vmax.f32 %v98, 0.0
    %v112 = vmax.f32 %v101, 0.0
    %v113 = vmax.f32 %v106, 0.0
    %v114 = vpack.c.bf16 %v112, %v111
    %v115 = vpack.c.bf16 %v113, %v113
    %v116 = vld [vmem:[%s3] sm:$0xf]
    %v117 = vld [vmem:[%s3 + $0x4] sm:$0xf]
    %v118 = vld [vmem:[%s3 + $0x8] sm:$0xf]
    %v119 = vld [vmem:[%s3 + $0xc] sm:$0xf]
    %v120 = vld [vmem:[%s3 + $0x10] sm:$0xf]
    %v121 = vld [vmem:[%s3 + $0x14] sm:$0xf]
    %v122 = vld [vmem:[%s3 + $0x18] sm:$0xf]
    %v123 = vld [vmem:[%s3 + $0x1c] sm:$0xf]
    %v124 = vld [vmem:[%s4] sm:$0x1]
    %v126 = vlaneseq
    %v127 = vshrl.u32 %v126, 7
    %v128 = vsub.s32 0, %v127
    %v129 = vrot.slane %v124, %v128
    %v139 = vunpack.c.l.b16 %v116
    %v140 = vunpack.c.l.b16 %v117
    %v141 = vunpack.c.l.b16 %v118
    %v142 = vunpack.c.l.b16 %v119
    %v143 = vunpack.c.l.b16 %v120
    %v144 = vunpack.c.l.b16 %v121
    %v145 = vunpack.c.l.b16 %v122
    %v146 = vunpack.c.l.b16 %v123
    %v147 = vpack.c.b16 %v140, %v139
    %v148 = vpack.c.b16 %v142, %v141
    %v149 = vpack.c.b16 %v144, %v143
    %v150 = vpack.c.b16 %v146, %v145
    %vm155 = vcmask 523264
    %v157 = vsel %vm155, %v114, 0
    %v160 = vsel %vm155, %v115, 0
    %162 = vmatprep.subr.bf16.mxu0 0
    %163 = vmatpush1.bf16.msra.mxu0 %v147
    %164 = vmatprep.subr.bf16.mxu0 0
    %165 = vmatpush1.bf16.msra.mxu0 %v148
    %166 = vmatprep.subr.bf16.mxu0 0
    %167 = vmatpush1.bf16.msra.mxu0 %v149
    %168 = vmatprep.subr.bf16.mxu0 0
    %169 = vmatpush1.bf16.msra.mxu0 %v150
    %170 = vmatprep.subr.bf16.mxu0 0
    %171 = vmatpush1.bf16.msra.mxu0 0
    %172 = vmatprep.subr.bf16.mxu0 0
    %173 = vmatpush1.bf16.msra.mxu0 0
    %174 = vmatprep.subr.bf16.mxu0 0
    %175 = vmatpush1.bf16.msra.mxu0 0
    %176 = vmatprep.subr.bf16.mxu0 0
    %177 = vmatpush1.bf16.msra.mxu0 0
    %178 = vmatprep.subr.bf16.mxu0 0
    %179 = vmatpush1.bf16.msra.mxu0 0
    %180 = vmatprep.subr.bf16.mxu0 0
    %181 = vmatpush1.bf16.msra.mxu0 0
    %182 = vmatprep.subr.bf16.mxu0 0
    %183 = vmatpush1.bf16.msra.mxu0 0
    %184 = vmatprep.subr.bf16.mxu0 0
    %185 = vmatpush1.bf16.msra.mxu0 0
    %186 = vmatprep.subr.bf16.mxu0 0
    %187 = vmatpush1.bf16.msra.mxu0 0
    %188 = vmatprep.subr.bf16.mxu0 0
    %189 = vmatpush1.bf16.msra.mxu0 0
    %190 = vmatprep.subr.bf16.mxu0 0
    %191 = vmatpush1.bf16.msra.mxu0 0
    %192 = vmatprep.subr.bf16.mxu0 0
    %193 = vmatpush1.bf16.msra.mxu0 0
    %194 = vmatprep.mubr.bf16.mxu0 0
    %195 = vmatmul.mubr.bf16.gmra.mrb[0].mxu0 %v157
    %v196 = vpop.f32.mrb[0].mxu0
    %v197 = vadd.f32 %v129, %v196
    %v198 = vpop.f32.mrb[0].mxu0
    %v199 = vpop.f32.mrb[0].mxu0
    %v200 = vadd.f32 %v129, %v199
    %v201 = vpop.f32.mrb[0].mxu0
    %202 = vmatprep.mubr.bf16.mxu0 0
    %203 = vmatmul.mubr.bf16.gmra.mrb[0].mxu0 %v160
    %v204 = vpop.f32.mrb[0].mxu0
    %v205 = vadd.f32 %v129, %v204
    %v206 = vpop.f32.mrb[0].mxu0
    %v207 = vpop.f32.mrb[0].mxu0
    %v208 = vpop.f32.mrb[0].mxu0
    %209 = vdwg.mxu0
    %v210 = vmax.f32 %v197, 0.0
    %v211 = vmax.f32 %v200, 0.0
    %v212 = vmax.f32 %v205, 0.0
    %v213 = vpack.c.bf16 %v211, %v210
    %v214 = vpack.c.bf16 %v212, %v212
    %v215 = vld [vmem:[%s5] sm:$0xff]
    %v216 = vld [vmem:[%s5 + $0x8] sm:$0xff]
    %v217 = vld [vmem:[%s5 + $0x10] sm:$0xff]
    %v218 = vld [vmem:[%s5 + $0x18] sm:$0xf]
    %v219 = vld [vmem:[%s5 + $0x1c] sm:$0xff]
    %v220 = vld [vmem:[%s5 + $0x24] sm:$0xff]
    %v221 = vld [vmem:[%s5 + $0x2c] sm:$0xff]
    %v222 = vld [vmem:[%s5 + $0x34] sm:$0xf]
    %v223 = vld [vmem:[%s5 + $0x38] sm:$0xff]
    %v224 = vld [vmem:[%s5 + $0x40] sm:$0xff]
    %v225 = vld [vmem:[%s5 + $0x48] sm:$0xff]
    %v226 = vld [vmem:[%s5 + $0x50] sm:$0xf]
    %v227 = vld [vmem:[%s5 + $0x54] sm:$0xff]
    %v228 = vld [vmem:[%s5 + $0x5c] sm:$0xff]
    %v229 = vld [vmem:[%s5 + $0x64] sm:$0xff]
    %v230 = vld [vmem:[%s5 + $0x6c] sm:$0xf]
    %v231 = vld [vmem:[%s5 + $0x70] sm:$0xff]
    %v232 = vld [vmem:[%s5 + $0x78] sm:$0xff]
    %v233 = vld [vmem:[%s5 + $0x80] sm:$0xff]
    %v234 = vld [vmem:[%s5 + $0x88] sm:$0xf]
    %v235 = vld [vmem:[%s5 + $0x8c] sm:$0xff]
    %v236 = vld [vmem:[%s5 + $0x94] sm:$0xff]
    %v237 = vld [vmem:[%s5 + $0x9c] sm:$0xff]
    %v238 = vld [vmem:[%s5 + $0xa4] sm:$0xf]
    %v239 = vld [vmem:[%s5 + $0xa8] sm:$0xff]
    %v240 = vld [vmem:[%s5 + $0xb0] sm:$0xff]
    %v241 = vld [vmem:[%s5 + $0xb8] sm:$0xff]
    %v242 = vld [vmem:[%s5 + $0xc0] sm:$0xf]
    %v243 = vld [vmem:[%s5 + $0xc4] sm:$0xff]
    %v244 = vld [vmem:[%s5 + $0xcc] sm:$0xff]
    %v245 = vld [vmem:[%s5 + $0xd4] sm:$0xff]
    %v246 = vld [vmem:[%s5 + $0xdc] sm:$0xf]
    %v247 = vld [vmem:[%s5 + $0xe0] sm:$0xff]
    %v248 = vld [vmem:[%s5 + $0xe8] sm:$0xff]
    %v249 = vld [vmem:[%s5 + $0xf0] sm:$0xff]
    %v250 = vld [vmem:[%s5 + $0xf8] sm:$0xf]
    %v251 = vld [vmem:[%s5 + $0xfc] sm:$0xff]
    %v252 = vld [vmem:[%s5 + $0x104] sm:$0xff]
    %v253 = vld [vmem:[%s5 + $0x10c] sm:$0xff]
    %v254 = vld [vmem:[%s5 + $0x114] sm:$0xf]
    %v255 = vld [vmem:[%s5 + $0x118] sm:$0xff]
    %v256 = vld [vmem:[%s5 + $0x120] sm:$0xff]
    %v257 = vld [vmem:[%s5 + $0x128] sm:$0xff]
    %v258 = vld [vmem:[%s5 + $0x130] sm:$0xf]
    %v259 = vld [vmem:[%s5 + $0x134] sm:$0xff]
    %v260 = vld [vmem:[%s5 + $0x13c] sm:$0xff]
    %v261 = vld [vmem:[%s5 + $0x144] sm:$0xff]
    %v262 = vld [vmem:[%s5 + $0x14c] sm:$0xf]
    %v263 = vld [vmem:[%s5 + $0x150] sm:$0xff]
    %v264 = vld [vmem:[%s5 + $0x158] sm:$0xff]
    %v265 = vld [vmem:[%s5 + $0x160] sm:$0xff]
    %v266 = vld [vmem:[%s5 + $0x168] sm:$0xf]
    %v267 = vld [vmem:[%s5 + $0x16c] sm:$0xff]
    %v268 = vld [vmem:[%s5 + $0x174] sm:$0xff]
    %v269 = vld [vmem:[%s5 + $0x17c] sm:$0xff]
    %v270 = vld [vmem:[%s5 + $0x184] sm:$0xf]
    %v271 = vld [vmem:[%s5 + $0x188] sm:$0xff]
    %v272 = vld [vmem:[%s5 + $0x190] sm:$0xff]
    %v273 = vld [vmem:[%s5 + $0x198] sm:$0xff]
    %v274 = vld [vmem:[%s5 + $0x1a0] sm:$0xf]
    %v275 = vld [vmem:[%s5 + $0x1a4] sm:$0xff]
    %v276 = vld [vmem:[%s5 + $0x1ac] sm:$0xff]
    %v277 = vld [vmem:[%s5 + $0x1b4] sm:$0xff]
    %v278 = vld [vmem:[%s5 + $0x1bc] sm:$0xf]
    %v279 = vld [vmem:[%s6] sm:$0x7f]
    %v281 = vlaneseq
    %v282 = vshrl.u32 %v281, 7
    %v283 = vsub.s32 0, %v282
    %v284 = vrot.slane %v279, %v283
    %v285 = vlaneseq
    %v286 = vshrl.u32 %v285, 7
    %v287 = vsub.s32 1, %v286
    %v288 = vrot.slane %v279, %v287
    %v289 = vlaneseq
    %v290 = vshrl.u32 %v289, 7
    %v291 = vsub.s32 2, %v290
    %v292 = vrot.slane %v279, %v291
    %v293 = vlaneseq
    %v294 = vshrl.u32 %v293, 7
    %v295 = vsub.s32 3, %v294
    %v296 = vrot.slane %v279, %v295
    %v297 = vlaneseq
    %v298 = vshrl.u32 %v297, 7
    %v299 = vsub.s32 4, %v298
    %v300 = vrot.slane %v279, %v299
    %v301 = vlaneseq
    %v302 = vshrl.u32 %v301, 7
    %v303 = vsub.s32 5, %v302
    %v304 = vrot.slane %v279, %v303
    %v305 = vlaneseq
    %v306 = vshrl.u32 %v305, 7
    %v307 = vsub.s32 6, %v306
    %v308 = vrot.slane %v279, %v307
    %v380 = vunpack.c.l.b16 %v215
    %v381 = vunpack.c.h.b16 %v215
    %v382 = vunpack.c.l.b16 %v216
    %v383 = vunpack.c.h.b16 %v216
    %v384 = vunpack.c.l.b16 %v217
    %v385 = vunpack.c.h.b16 %v217
    %v386 = vunpack.c.l.b16 %v218
    %v387 = vunpack.c.l.b16 %v219
    %v388 = vunpack.c.h.b16 %v219
    %v389 = vunpack.c.l.b16 %v220
    %v390 = vunpack.c.h.b16 %v220
    %v391 = vunpack.c.l.b16 %v221
    %v392 = vunpack.c.h.b16 %v221
    %v393 = vunpack.c.l.b16 %v222
    %v394 = vunpack.c.l.b16 %v223
    %v395 = vunpack.c.h.b16 %v223
    %v396 = vunpack.c.l.b16 %v224
    %v397 = vunpack.c.h.b16 %v224
    %v398 = vunpack.c.l.b16 %v225
    %v399 = vunpack.c.h.b16 %v225
    %v400 = vunpack.c.l.b16 %v226
    %v401 = vunpack.c.l.b16 %v227
    %v402 = vunpack.c.h.b16 %v227
    %v403 = vunpack.c.l.b16 %v228
    %v404 = vunpack.c.h.b16 %v228
    %v405 = vunpack.c.l.b16 %v229
    %v406 = vunpack.c.h.b16 %v229
    %v407 = vunpack.c.l.b16 %v230
    %v408 = vunpack.c.l.b16 %v231
    %v409 = vunpack.c.h.b16 %v231
    %v410 = vunpack.c.l.b16 %v232
    %v411 = vunpack.c.h.b16 %v232
    %v412 = vunpack.c.l.b16 %v233
    %v413 = vunpack.c.h.b16 %v233
    %v414 = vunpack.c.l.b16 %v234
    %v415 = vunpack.c.l.b16 %v235
    %v416 = vunpack.c.h.b16 %v235
    %v417 = vunpack.c.l.b16 %v236
    %v418 = vunpack.c.h.b16 %v236
    %v419 = vunpack.c.l.b16 %v237
    %v420 = vunpack.c.h.b16 %v237
    %v421 = vunpack.c.l.b16 %v238
    %v422 = vunpack.c.l.b16 %v239
    %v423 = vunpack.c.h.b16 %v239
    %v424 = vunpack.c.l.b16 %v240
    %v425 = vunpack.c.h.b16 %v240
    %v426 = vunpack.c.l.b16 %v241
    %v427 = vunpack.c.h.b16 %v241
    %v428 = vunpack.c.l.b16 %v242
    %v429 = vunpack.c.l.b16 %v243
    %v430 = vunpack.c.h.b16 %v243
    %v431 = vunpack.c.l.b16 %v244
    %v432 = vunpack.c.h.b16 %v244
    %v433 = vunpack.c.l.b16 %v245
    %v434 = vunpack.c.h.b16 %v245
    %v435 = vunpack.c.l.b16 %v246
    %v436 = vunpack.c.l.b16 %v247
    %v437 = vunpack.c.h.b16 %v247
    %v438 = vunpack.c.l.b16 %v248
    %v439 = vunpack.c.h.b16 %v248
    %v440 = vunpack.c.l.b16 %v249
    %v441 = vunpack.c.h.b16 %v249
    %v442 = vunpack.c.l.b16 %v250
    %v443 = vunpack.c.l.b16 %v251
    %v444 = vunpack.c.h.b16 %v251
    %v445 = vunpack.c.l.b16 %v252
    %v446 = vunpack.c.h.b16 %v252
    %v447 = vunpack.c.l.b16 %v253
    %v448 = vunpack.c.h.b16 %v253
    %v449 = vunpack.c.l.b16 %v254
    %v450 = vunpack.c.l.b16 %v255
    %v451 = vunpack.c.h.b16 %v255
    %v452 = vunpack.c.l.b16 %v256
    %v453 = vunpack.c.h.b16 %v256
    %v454 = vunpack.c.l.b16 %v257
    %v455 = vunpack.c.h.b16 %v257
    %v456 = vunpack.c.l.b16 %v258
    %v457 = vunpack.c.l.b16 %v259
    %v458 = vunpack.c.h.b16 %v259
    %v459 = vunpack.c.l.b16 %v260
    %v460 = vunpack.c.h.b16 %v260
    %v461 = vunpack.c.l.b16 %v261
    %v462 = vunpack.c.h.b16 %v261
    %v463 = vunpack.c.l.b16 %v262
    %v464 = vunpack.c.l.b16 %v263
    %v465 = vunpack.c.h.b16 %v263
    %v466 = vunpack.c.l.b16 %v264
    %v467 = vunpack.c.h.b16 %v264
    %v468 = vunpack.c.l.b16 %v265
    %v469 = vunpack.c.h.b16 %v265
    %v470 = vunpack.c.l.b16 %v266
    %v471 = vunpack.c.l.b16 %v267
    %v472 = vunpack.c.h.b16 %v267
    %v473 = vunpack.c.l.b16 %v268
    %v474 = vunpack.c.h.b16 %v268
    %v475 = vunpack.c.l.b16 %v269
    %v476 = vunpack.c.h.b16 %v269
    %v477 = vunpack.c.l.b16 %v270
    %v478 = vunpack.c.l.b16 %v271
    %v479 = vunpack.c.h.b16 %v271
    %v480 = vunpack.c.l.b16 %v272
    %v481 = vunpack.c.h.b16 %v272
    %v482 = vunpack.c.l.b16 %v273
    %v483 = vunpack.c.h.b16 %v273
    %v484 = vunpack.c.l.b16 %v274
    %v485 = vunpack.c.l.b16 %v275
    %v486 = vunpack.c.h.b16 %v275
    %v487 = vunpack.c.l.b16 %v276
    %v488 = vunpack.c.h.b16 %v276
    %v489 = vunpack.c.l.b16 %v277
    %v490 = vunpack.c.h.b16 %v277
    %v491 = vunpack.c.l.b16 %v278
    %v492 = vpack.c.b16 %v387, %v380
    %v493 = vpack.c.b16 %v388, %v381
    %v494 = vpack.c.b16 %v389, %v382
    %v495 = vpack.c.b16 %v390, %v383
    %v496 = vpack.c.b16 %v391, %v384
    %v497 = vpack.c.b16 %v392, %v385
    %v498 = vpack.c.b16 %v393, %v386
    %v499 = vpack.c.b16 %v401, %v394
    %v500 = vpack.c.b16 %v402, %v395
    %v501 = vpack.c.b16 %v403, %v396
    %v502 = vpack.c.b16 %v404, %v397
    %v503 = vpack.c.b16 %v405, %v398
    %v504 = vpack.c.b16 %v406, %v399
    %v505 = vpack.c.b16 %v407, %v400
    %v506 = vpack.c.b16 %v415, %v408
    %v507 = vpack.c.b16 %v416, %v409
    %v508 = vpack.c.b16 %v417, %v410
    %v509 = vpack.c.b16 %v418, %v411
    %v510 = vpack.c.b16 %v419, %v412
    %v511 = vpack.c.b16 %v420, %v413
    %v512 = vpack.c.b16 %v421, %v414
    %v513 = vpack.c.b16 %v429, %v422
    %v514 = vpack.c.b16 %v430, %v423
    %v515 = vpack.c.b16 %v431, %v424
    %v516 = vpack.c.b16 %v432, %v425
    %v517 = vpack.c.b16 %v433, %v426
    %v518 = vpack.c.b16 %v434, %v427
    %v519 = vpack.c.b16 %v435, %v428
    %v520 = vpack.c.b16 %v443, %v436
    %v521 = vpack.c.b16 %v444, %v437
    %v522 = vpack.c.b16 %v445, %v438
    %v523 = vpack.c.b16 %v446, %v439
    %v524 = vpack.c.b16 %v447, %v440
    %v525 = vpack.c.b16 %v448, %v441
    %v526 = vpack.c.b16 %v449, %v442
    %v527 = vpack.c.b16 %v457, %v450
    %v528 = vpack.c.b16 %v458, %v451
    %v529 = vpack.c.b16 %v459, %v452
    %v530 = vpack.c.b16 %v460, %v453
    %v531 = vpack.c.b16 %v461, %v454
    %v532 = vpack.c.b16 %v462, %v455
    %v533 = vpack.c.b16 %v463, %v456
    %v534 = vpack.c.b16 %v471, %v464
    %v535 = vpack.c.b16 %v472, %v465
    %v536 = vpack.c.b16 %v473, %v466
    %v537 = vpack.c.b16 %v474, %v467
    %v538 = vpack.c.b16 %v475, %v468
    %v539 = vpack.c.b16 %v476, %v469
    %v540 = vpack.c.b16 %v477, %v470
    %v541 = vpack.c.b16 %v485, %v478
    %v542 = vpack.c.b16 %v486, %v479
    %v543 = vpack.c.b16 %v487, %v480
    %v544 = vpack.c.b16 %v488, %v481
    %v545 = vpack.c.b16 %v489, %v482
    %v546 = vpack.c.b16 %v490, %v483
    %v547 = vpack.c.b16 %v491, %v484
    %604 = vmatprep.subr.bf16.mxu0 %v493
    %605 = vmatpush1.bf16.msra.mxu0 %v492
    %606 = vmatprep.subr.bf16.mxu0 %v500
    %607 = vmatpush1.bf16.msra.mxu0 %v499
    %608 = vmatprep.subr.bf16.mxu0 %v507
    %609 = vmatpush1.bf16.msra.mxu0 %v506
    %610 = vmatprep.subr.bf16.mxu0 %v514
    %611 = vmatpush1.bf16.msra.mxu0 %v513
    %612 = vmatprep.subr.bf16.mxu0 %v521
    %613 = vmatpush1.bf16.msra.mxu0 %v520
    %614 = vmatprep.subr.bf16.mxu0 %v528
    %615 = vmatpush1.bf16.msra.mxu0 %v527
    %616 = vmatprep.subr.bf16.mxu0 %v535
    %617 = vmatpush1.bf16.msra.mxu0 %v534
    %618 = vmatprep.subr.bf16.mxu0 %v542
    %619 = vmatpush1.bf16.msra.mxu0 %v541
    %620 = vmatprep.subr.bf16.mxu0 0
    %621 = vmatpush1.bf16.msra.mxu0 0
    %622 = vmatprep.subr.bf16.mxu0 0
    %623 = vmatpush1.bf16.msra.mxu0 0
    %624 = vmatprep.subr.bf16.mxu0 0
    %625 = vmatpush1.bf16.msra.mxu0 0
    %626 = vmatprep.subr.bf16.mxu0 0
    %627 = vmatpush1.bf16.msra.mxu0 0
    %628 = vmatprep.subr.bf16.mxu0 0
    %629 = vmatpush1.bf16.msra.mxu0 0
    %630 = vmatprep.subr.bf16.mxu0 0
    %631 = vmatpush1.bf16.msra.mxu0 0
    %632 = vmatprep.subr.bf16.mxu0 0
    %633 = vmatpush1.bf16.msra.mxu0 0
    %634 = vmatprep.subr.bf16.mxu0 0
    %635 = vmatpush1.bf16.msra.mxu0 0
    %636 = vmatprep.mubr.bf16.mxu0 0
    %637 = vmatmul.mubr.bf16.gmra.mrb[0].mxu0 %v213
    %v638 = vpop.f32.mrb[0].mxu0
    %v639 = vadd.f32 %v284, %v638
    %v640 = vpop.f32.mrb[0].mxu0
    %v641 = vadd.f32 %v288, %v640
    %v642 = vpop.f32.mrb[0].mxu0
    %v643 = vadd.f32 %v284, %v642
    %v644 = vpop.f32.mrb[0].mxu0
    %v645 = vadd.f32 %v288, %v644
    %646 = vmatprep.mubr.bf16.mxu0 0
    %647 = vmatmul.mubr.bf16.gmra.mrb[0].mxu0 %v214
    %v648 = vpop.f32.mrb[0].mxu0
    %v649 = vadd.f32 %v284, %v648
    %v650 = vpop.f32.mrb[0].mxu0
    %v651 = vadd.f32 %v288, %v650
    %v652 = vpop.f32.mrb[0].mxu0
    %v653 = vpop.f32.mrb[0].mxu0
    %654 = vdwg.mxu0
    %655 = vmatprep.subr.bf16.mxu0 %v495
    %656 = vmatpush1.bf16.msra.mxu0 %v494
    %657 = vmatprep.subr.bf16.mxu0 %v502
    %658 = vmatpush1.bf16.msra.mxu0 %v501
    %659 = vmatprep.subr.bf16.mxu0 %v509
    %660 = vmatpush1.bf16.msra.mxu0 %v508
    %661 = vmatprep.subr.bf16.mxu0 %v516
    %662 = vmatpush1.bf16.msra.mxu0 %v515
    %663 = vmatprep.subr.bf16.mxu0 %v523
    %664 = vmatpush1.bf16.msra.mxu0 %v522
    %665 = vmatprep.subr.bf16.mxu0 %v530
    %666 = vmatpush1.bf16.msra.mxu0 %v529
    %667 = vmatprep.subr.bf16.mxu0 %v537
    %668 = vmatpush1.bf16.msra.mxu0 %v536
    %669 = vmatprep.subr.bf16.mxu0 %v544
    %670 = vmatpush1.bf16.msra.mxu0 %v543
    %671 = vmatprep.subr.bf16.mxu0 0
    %672 = vmatpush1.bf16.msra.mxu0 0
    %673 = vmatprep.subr.bf16.mxu0 0
    %674 = vmatpush1.bf16.msra.mxu0 0
    %675 = vmatprep.subr.bf16.mxu0 0
    %676 = vmatpush1.bf16.msra.mxu0 0
    %677 = vmatprep.subr.bf16.mxu0 0
    %678 = vmatpush1.bf16.msra.mxu0 0
    %679 = vmatprep.subr.bf16.mxu0 0
    %680 = vmatpush1.bf16.msra.mxu0 0
    %681 = vmatprep.subr.bf16.mxu0 0
    %682 = vmatpush1.bf16.msra.mxu0 0
    %683 = vmatprep.subr.bf16.mxu0 0
    %684 = vmatpush1.bf16.msra.mxu0 0
    %685 = vmatprep.subr.bf16.mxu0 0
    %686 = vmatpush1.bf16.msra.mxu0 0
    %687 = vmatprep.mubr.bf16.mxu0 0
    %688 = vmatmul.mubr.bf16.gmra.mrb[0].mxu0 %v213
    %v689 = vpop.f32.mrb[0].mxu0
    %v690 = vadd.f32 %v292, %v689
    %v691 = vpop.f32.mrb[0].mxu0
    %v692 = vadd.f32 %v296, %v691
    %v693 = vpop.f32.mrb[0].mxu0
    %v694 = vadd.f32 %v292, %v693
    %v695 = vpop.f32.mrb[0].mxu0
    %v696 = vadd.f32 %v296, %v695
    %697 = vmatprep.mubr.bf16.mxu0 0
    %698 = vmatmul.mubr.bf16.gmra.mrb[0].mxu0 %v214
    %v699 = vpop.f32.mrb[0].mxu0
    %v700 = vadd.f32 %v292, %v699
    %v701 = vpop.f32.mrb[0].mxu0
    %v702 = vadd.f32 %v296, %v701
    %v703 = vpop.f32.mrb[0].mxu0
    %v704 = vpop.f32.mrb[0].mxu0
    %705 = vdwg.mxu0
    %706 = vmatprep.subr.bf16.mxu0 %v497
    %707 = vmatpush1.bf16.msra.mxu0 %v496
    %708 = vmatprep.subr.bf16.mxu0 %v504
    %709 = vmatpush1.bf16.msra.mxu0 %v503
    %710 = vmatprep.subr.bf16.mxu0 %v511
    %711 = vmatpush1.bf16.msra.mxu0 %v510
    %712 = vmatprep.subr.bf16.mxu0 %v518
    %713 = vmatpush1.bf16.msra.mxu0 %v517
    %714 = vmatprep.subr.bf16.mxu0 %v525
    %715 = vmatpush1.bf16.msra.mxu0 %v524
    %716 = vmatprep.subr.bf16.mxu0 %v532
    %717 = vmatpush1.bf16.msra.mxu0 %v531
    %718 = vmatprep.subr.bf16.mxu0 %v539
    %719 = vmatpush1.bf16.msra.mxu0 %v538
    %720 = vmatprep.subr.bf16.mxu0 %v546
    %721 = vmatpush1.bf16.msra.mxu0 %v545
    %722 = vmatprep.subr.bf16.mxu0 0
    %723 = vmatpush1.bf16.msra.mxu0 0
    %724 = vmatprep.subr.bf16.mxu0 0
    %725 = vmatpush1.bf16.msra.mxu0 0
    %726 = vmatprep.subr.bf16.mxu0 0
    %727 = vmatpush1.bf16.msra.mxu0 0
    %728 = vmatprep.subr.bf16.mxu0 0
    %729 = vmatpush1.bf16.msra.mxu0 0
    %730 = vmatprep.subr.bf16.mxu0 0
    %731 = vmatpush1.bf16.msra.mxu0 0
    %732 = vmatprep.subr.bf16.mxu0 0
    %733 = vmatpush1.bf16.msra.mxu0 0
    %734 = vmatprep.subr.bf16.mxu0 0
    %735 = vmatpush1.bf16.msra.mxu0 0
    %736 = vmatprep.subr.bf16.mxu0 0
    %737 = vmatpush1.bf16.msra.mxu0 0
    %738 = vmatprep.mubr.bf16.mxu0 0
    %739 = vmatmul.mubr.bf16.gmra.mrb[0].mxu0 %v213
    %v740 = vpop.f32.mrb[0].mxu0
    %v741 = vadd.f32 %v300, %v740
    %v742 = vpop.f32.mrb[0].mxu0
    %v743 = vadd.f32 %v304, %v742
    %v744 = vpop.f32.mrb[0].mxu0
    %v745 = vadd.f32 %v300, %v744
    %v746 = vpop.f32.mrb[0].mxu0
    %v747 = vadd.f32 %v304, %v746
    %748 = vmatprep.mubr.bf16.mxu0 0
    %749 = vmatmul.mubr.bf16.gmra.mrb[0].mxu0 %v214
    %v750 = vpop.f32.mrb[0].mxu0
    %v751 = vadd.f32 %v300, %v750
    %v752 = vpop.f32.mrb[0].mxu0
    %v753 = vadd.f32 %v304, %v752
    %v754 = vpop.f32.mrb[0].mxu0
    %v755 = vpop.f32.mrb[0].mxu0
    %756 = vdwg.mxu0
    %757 = vmatprep.subr.bf16.mxu0 0
    %758 = vmatpush1.bf16.msra.mxu0 %v498
    %759 = vmatprep.subr.bf16.mxu0 0
    %760 = vmatpush1.bf16.msra.mxu0 %v505
    %761 = vmatprep.subr.bf16.mxu0 0
    %762 = vmatpush1.bf16.msra.mxu0 %v512
    %763 = vmatprep.subr.bf16.mxu0 0
    %764 = vmatpush1.bf16.msra.mxu0 %v519
    %765 = vmatprep.subr.bf16.mxu0 0
    %766 = vmatpush1.bf16.msra.mxu0 %v526
    %767 = vmatprep.subr.bf16.mxu0 0
    %768 = vmatpush1.bf16.msra.mxu0 %v533
    %769 = vmatprep.subr.bf16.mxu0 0
    %770 = vmatpush1.bf16.msra.mxu0 %v540
    %771 = vmatprep.subr.bf16.mxu0 0
    %772 = vmatpush1.bf16.msra.mxu0 %v547
    %773 = vmatprep.subr.bf16.mxu0 0
    %774 = vmatpush1.bf16.msra.mxu0 0
    %775 = vmatprep.subr.bf16.mxu0 0
    %776 = vmatpush1.bf16.msra.mxu0 0
    %777 = vmatprep.subr.bf16.mxu0 0
    %778 = vmatpush1.bf16.msra.mxu0 0
    %779 = vmatprep.subr.bf16.mxu0 0
    %780 = vmatpush1.bf16.msra.mxu0 0
    %781 = vmatprep.subr.bf16.mxu0 0
    %782 = vmatpush1.bf16.msra.mxu0 0
    %783 = vmatprep.subr.bf16.mxu0 0
    %784 = vmatpush1.bf16.msra.mxu0 0
    %785 = vmatprep.subr.bf16.mxu0 0
    %786 = vmatpush1.bf16.msra.mxu0 0
    %787 = vmatprep.subr.bf16.mxu0 0
    %788 = vmatpush1.bf16.msra.mxu0 0
    %789 = vmatprep.mubr.bf16.mxu0 0
    %790 = vmatmul.mubr.bf16.gmra.mrb[0].mxu0 %v213
    %v791 = vpop.f32.mrb[0].mxu0
    %v792 = vadd.f32 %v308, %v791
    %v793 = vpop.f32.mrb[0].mxu0
    %v794 = vpop.f32.mrb[0].mxu0
    %v795 = vadd.f32 %v308, %v794
    %v796 = vpop.f32.mrb[0].mxu0
    %797 = vmatprep.mubr.bf16.mxu0 0
    %798 = vmatmul.mubr.bf16.gmra.mrb[0].mxu0 %v214
    %v799 = vpop.f32.mrb[0].mxu0
    %v800 = vadd.f32 %v308, %v799
    %v801 = vpop.f32.mrb[0].mxu0
    %v802 = vpop.f32.mrb[0].mxu0
    %v803 = vpop.f32.mrb[0].mxu0
    %804 = vdwg.mxu0
    %v805 = vmul.f32 %v639, 0.5
    %v806 = vmul.f32 %v641, 0.5
    %v807 = vmul.f32 %v690, 0.5
    %v808 = vmul.f32 %v692, 0.5
    %v809 = vmul.f32 %v741, 0.5
    %v810 = vmul.f32 %v743, 0.5
    %v811 = vmul.f32 %v792, 0.5
    %v812 = vmul.f32 %v643, 0.5
    %v813 = vmul.f32 %v645, 0.5
    %v814 = vmul.f32 %v694, 0.5
    %v815 = vmul.f32 %v696, 0.5
    %v816 = vmul.f32 %v745, 0.5
    %v817 = vmul.f32 %v747, 0.5
    %v818 = vmul.f32 %v795, 0.5
    %v819 = vmul.f32 %v649, 0.5
    %v820 = vmul.f32 %v651, 0.5
    %v821 = vmul.f32 %v700, 0.5
    %v822 = vmul.f32 %v702, 0.5
    %v823 = vmul.f32 %v751, 0.5
    %v824 = vmul.f32 %v753, 0.5
    %v825 = vmul.f32 %v800, 0.5
    %v826 = vtanh.pop %v805
    %v827 = vtanh.pop %v806
    %v828 = vtanh.pop %v807
    %v829 = vtanh.pop %v808
    %v830 = vtanh.pop %v809
    %v831 = vtanh.pop %v810
    %v832 = vtanh.pop %v811
    %v833 = vtanh.pop %v812
    %v834 = vtanh.pop %v813
    %v835 = vtanh.pop %v814
    %v836 = vtanh.pop %v815
    %v837 = vtanh.pop %v816
    %v838 = vtanh.pop %v817
    %v839 = vtanh.pop %v818
    %v840 = vtanh.pop %v819
    %v841 = vtanh.pop %v820
    %v842 = vtanh.pop %v821
    %v843 = vtanh.pop %v822
    %v844 = vtanh.pop %v823
    %v845 = vtanh.pop %v824
    %v846 = vtanh.pop %v825
    %v847 = vmul.f32 %v826, 0.5
    %v848 = vmul.f32 %v827, 0.5
    %v849 = vmul.f32 %v828, 0.5
    %v850 = vmul.f32 %v829, 0.5
    %v851 = vmul.f32 %v830, 0.5
    %v852 = vmul.f32 %v831, 0.5
    %v853 = vmul.f32 %v832, 0.5
    %v854 = vmul.f32 %v833, 0.5
    %v855 = vmul.f32 %v834, 0.5
    %v856 = vmul.f32 %v835, 0.5
    %v857 = vmul.f32 %v836, 0.5
    %v858 = vmul.f32 %v837, 0.5
    %v859 = vmul.f32 %v838, 0.5
    %v860 = vmul.f32 %v839, 0.5
    %v861 = vmul.f32 %v840, 0.5
    %v862 = vmul.f32 %v841, 0.5
    %v863 = vmul.f32 %v842, 0.5
    %v864 = vmul.f32 %v843, 0.5
    %v865 = vmul.f32 %v844, 0.5
    %v866 = vmul.f32 %v845, 0.5
    %v867 = vmul.f32 %v846, 0.5
    %v868 = vadd.f32 %v847, 0.5
    %v869 = vadd.f32 %v848, 0.5
    %v870 = vadd.f32 %v849, 0.5
    %v871 = vadd.f32 %v850, 0.5
    %v872 = vadd.f32 %v851, 0.5
    %v873 = vadd.f32 %v852, 0.5
    %v874 = vadd.f32 %v853, 0.5
    %v875 = vadd.f32 %v854, 0.5
    %v876 = vadd.f32 %v855, 0.5
    %v877 = vadd.f32 %v856, 0.5
    %v878 = vadd.f32 %v857, 0.5
    %v879 = vadd.f32 %v858, 0.5
    %v880 = vadd.f32 %v859, 0.5
    %v881 = vadd.f32 %v860, 0.5
    %v882 = vadd.f32 %v861, 0.5
    %v883 = vadd.f32 %v862, 0.5
    %v884 = vadd.f32 %v863, 0.5
    %v885 = vadd.f32 %v864, 0.5
    %v886 = vadd.f32 %v865, 0.5
    %v887 = vadd.f32 %v866, 0.5
    %v888 = vadd.f32 %v867, 0.5
    %889 = vst [vmem:[#allocation2] sm:$0xff] %v868
    %890 = vst [vmem:[#allocation2 + $0x8] sm:$0xff] %v869
    %891 = vst [vmem:[#allocation2 + $0x10] sm:$0xff] %v870
    %892 = vst [vmem:[#allocation2 + $0x18] sm:$0xff] %v871
    %893 = vst [vmem:[#allocation2 + $0x20] sm:$0xff] %v872
    %894 = vst [vmem:[#allocation2 + $0x28] sm:$0xff] %v873
    %vm895 = vcmask 130048
    %896 = vst.msk [vmem:[#allocation2 + $0x30] sm:$0xff] %vm895, %v874
    %897 = vst [vmem:[#allocation2 + $0x38] sm:$0xff] %v875
    %898 = vst [vmem:[#allocation2 + $0x40] sm:$0xff] %v876
    %899 = vst [vmem:[#allocation2 + $0x48] sm:$0xff] %v877
    %900 = vst [vmem:[#allocation2 + $0x50] sm:$0xff] %v878
    %901 = vst [vmem:[#allocation2 + $0x58] sm:$0xff] %v879
    %902 = vst [vmem:[#allocation2 + $0x60] sm:$0xff] %v880
    %903 = vst.msk [vmem:[#allocation2 + $0x68] sm:$0xff] %vm895, %v881
    %904 = vst [vmem:[#allocation2 + $0x70] sm:$0xff] %v882
    %905 = vst [vmem:[#allocation2 + $0x78] sm:$0xff] %v883
    %906 = vst [vmem:[#allocation2 + $0x80] sm:$0xff] %v884
    %907 = vst [vmem:[#allocation2 + $0x88] sm:$0xff] %v885
    %908 = vst [vmem:[#allocation2 + $0x90] sm:$0xff] %v886
    %909 = vst [vmem:[#allocation2 + $0x98] sm:$0xff] %v887
    %910 = vst.msk [vmem:[#allocation2 + $0xa0] sm:$0xff] %vm895, %v888
    // Predicated region
    $region30: #{tpu_custom_call.1} parent=1 // pred_check
      _
    $region31: #{tpu_custom_call.1} parent=1 // pred_check_branch
      %912 = sbr.rel (0) target = $region33
    $region32: #{tpu_custom_call.1} parent=1 // pred_region
      %s914 = ssub.s32 2688, 2688
      %915 = vsyncadd [#allocation3], %s914
      %s916 = sshll.u32 [#allocation2], 4
      %s917 = int_to_ptr.vmem [resolvable:$true] %s916
      %922 = dma.vmem_to_hbm [thread:$0]  %s917, 2688, %s7, [#allocation3], 896, 896, 56
    $region33: #{tpu_custom_call.1} parent=1 // pred_fallthru
      _
    // Predicated region
    $region34: #{tpu_custom_call.1} parent=1 // pred_check
      _
    $region35: #{tpu_custom_call.1} parent=1 // pred_check_branch
      %924 = sbr.rel (0) target = $region37
    $region36: #{tpu_custom_call.1} parent=1 // pred_region
      %925 = dma.done [#allocation3], 2688
    $region37: #{tpu_custom_call.1} parent=1 // pred_fallthru
      _
    %926 = vsyncpa [#allocation3], 1

</llo_original>
